<compile_context>
chip_gen: v7x
topology: tpu7x:2x2x1
jax: 0.10.0
libtpu: 0.0.40
codegen_flags: <defaults>
</compile_context>

<pallas_src>
import functools

import jax
import jax.numpy as jnp
from jax.experimental import pallas as pl
from jax.experimental.pallas import tpu as pltpu

INPUT_SIZE = 784
HIDDEN_SIZE = 100
OUTPUT_SIZE = 10

HID_PAD = 128  # lane-aligned hidden width used inside the kernel (zero-padded, exact)

MAX_TILE_B_F32 = 1024   # ~3.2 MiB/x-buffer -> ~6.4 MiB double-buffered (fits v5e 16 MiB default)
MAX_TILE_B_BF16 = 2048  # ~3.2 MiB/x-buffer in bf16


def _round_up(x, m):
    return (x + m - 1) // m * m


def _cdiv(a, b):
    return -(-a // b)


def _choose_tiling(B, use_bf16):
    """Pick (tile_b, padded_B). Keeps tiles VMEM-safe and grid >= 2 for B >= 256."""
    max_tile = MAX_TILE_B_BF16 if use_bf16 else MAX_TILE_B_F32
    align = 16 if use_bf16 else 8   # bf16 packs 2 rows/sublane
    if B < 2 * 128:
        tile_b = _round_up(max(B, 1), align)
        return tile_b, tile_b
    # >= 2 tiles so the "parallel" batch axis can shard across both v7x TensorCores;
    # tile size rounded to 128 rows to keep padding waste small for large B.
    num_tiles = max(2, _cdiv(B, max_tile))
    tile_b = _round_up(_cdiv(B, num_tiles), 128)
    return tile_b, tile_b * num_tiles


def mlp_kernel(x_ref, w1_ref, b1_ref, w2_ref, b2_ref, o_ref):
    # Layer 1 on the MXU with f32 accumulation; bias + ReLU on the VPU in f32.
    h = jnp.dot(x_ref[...], w1_ref[...], preferred_element_type=jnp.float32)
    h = jnp.maximum(h + b1_ref[...], 0.0)      # padded hidden cols stay exactly 0
    # Layer 2 (padded w2 rows are zero, padding contributes nothing).
    out = jnp.dot(h.astype(w2_ref.dtype), w2_ref[...],
                  preferred_element_type=jnp.float32)
    o_ref[...] = (out + b2_ref[...]).astype(o_ref.dtype)


def prepare_params(w1, b1, w2, b2, *, use_bf16=True):
    """Pad/cast parameters ONCE (outside the per-call forward).

    w1: [784, 100], b1: [1, 100], w2: [100, 10], b2: [1, 10]  (x @ w + b convention,
    i.e. weights are transposed vs. PyTorch's nn.Linear storage).
    """
    wd = jnp.bfloat16 if use_bf16 else jnp.float32
    w1p = jnp.zeros((INPUT_SIZE, HID_PAD), wd).at[:, :HIDDEN_SIZE].set(w1.astype(wd))
    b1p = jnp.zeros((1, HID_PAD), jnp.float32).at[:, :HIDDEN_SIZE].set(
        b1.reshape(1, HIDDEN_SIZE).astype(jnp.float32))
    w2p = jnp.zeros((HID_PAD, OUTPUT_SIZE), wd).at[:HIDDEN_SIZE, :].set(w2.astype(wd))
    b2p = b2.reshape(1, OUTPUT_SIZE).astype(jnp.float32)
    return w1p, b1p, w2p, b2p


@jax.jit
def neural_net_forward(x, w1p, b1p, w2p, b2p):
    """x: [B, 784]; padded params from prepare_params. Returns [B, 10] float32.

    For best perf feed x already in the params' compute dtype (bf16 by default);
    otherwise the cast below adds one fused pass over x.
    """
    B = x.shape[0]
    compute_dtype = w1p.dtype
    use_bf16 = compute_dtype == jnp.bfloat16
    tile_b, b_pad = _choose_tiling(B, use_bf16)

    xc = x.astype(compute_dtype)
    if b_pad != B:
        # Batch-only zero padding (K stays at its natural 784).
        xc = jnp.pad(xc, ((0, b_pad - B), (0, 0)))

    grid = (b_pad // tile_b,)
    x_bytes = jnp.dtype(compute_dtype).itemsize
    cost = pl.CostEstimate(
        flops=2 * b_pad * (INPUT_SIZE * HID_PAD + HID_PAD * OUTPUT_SIZE),
        transcendentals=0,
        bytes_accessed=(b_pad * INPUT_SIZE * x_bytes
                        + (INPUT_SIZE * HID_PAD + HID_PAD * OUTPUT_SIZE) * x_bytes
                        + (HID_PAD + OUTPUT_SIZE) * 4
                        + b_pad * OUTPUT_SIZE * 4),
    )

    out = pl.pallas_call(
        mlp_kernel,
        out_shape=jax.ShapeDtypeStruct((b_pad, OUTPUT_SIZE), jnp.float32),
        grid=grid,
        in_specs=[
            # x tile streams per grid step (double-buffered by the pipeline);
            # last block dim == full array dim (784), so no K padding is needed.
            pl.BlockSpec((tile_b, INPUT_SIZE), lambda i: (i, 0)),
            # Weights / biases: constant index_map -> stay VMEM-resident.
            pl.BlockSpec((INPUT_SIZE, HID_PAD), lambda i: (0, 0)),
            pl.BlockSpec((1, HID_PAD), lambda i: (0, 0)),
            pl.BlockSpec((HID_PAD, OUTPUT_SIZE), lambda i: (0, 0)),
            pl.BlockSpec((1, OUTPUT_SIZE), lambda i: (0, 0)),
        ],
        # Natural-width output (10 lanes): masked store, but output bytes are tiny
        # relative to the x read stream, and it removes the wrapper slice pass.
        out_specs=pl.BlockSpec((tile_b, OUTPUT_SIZE), lambda i: (i, 0)),
        compiler_params=pltpu.CompilerParams(
            dimension_semantics=("parallel",),  # independent batch tiles (megacore on v7x)
        ),
        cost_estimate=cost,
    )(xc, w1p, b1p, w2p, b2p)

    return out[:B]


def init_params(key):
    """Deterministic init mimicking nn.Linear's uniform(-1/sqrt(fan_in), 1/sqrt(fan_in))."""
    k1, k2, k3, k4 = jax.random.split(key, 4)
    bound1 = 1.0 / jnp.sqrt(INPUT_SIZE)
    bound2 = 1.0 / jnp.sqrt(HIDDEN_SIZE)
    w1 = jax.random.uniform(k1, (INPUT_SIZE, HIDDEN_SIZE), jnp.float32, -bound1, bound1)
    b1 = jax.random.uniform(k2, (1, HIDDEN_SIZE), jnp.float32, -bound1, bound1)
    w2 = jax.random.uniform(k3, (HIDDEN_SIZE, OUTPUT_SIZE), jnp.float32, -bound2, bound2)
    b2 = jax.random.uniform(k4, (1, OUTPUT_SIZE), jnp.float32, -bound2, bound2)
    return w1, b1, w2, b2


if __name__ == "__main__":
    key = jax.random.PRNGKey(0)
    k_x, k_p = jax.random.split(key)
    w1, b1, w2, b2 = init_params(k_p)

    # Small batch, f32 path: numerically exact up to MXU rounding.
    x = jax.random.normal(k_x, (8, INPUT_SIZE), jnp.float32)
    params_f32 = prepare_params(w1, b1, w2, b2, use_bf16=False)
    out = jax.block_until_ready(neural_net_forward(x, *params_f32))
    ref = jnp.maximum(x @ w1 + b1, 0.0) @ w2 + b2
    assert out.shape == (8, OUTPUT_SIZE)
    assert jnp.allclose(out, ref, atol=1e-4, rtol=1e-4)

    # Larger batch, bf16 performance default: multi-step grid (>= 2 tiles), batch pad path.
    xb = jax.random.normal(k_x, (384, INPUT_SIZE), jnp.float32)
    params_bf16 = prepare_params(w1, b1, w2, b2, use_bf16=True)
    out_b = jax.block_until_ready(neural_net_forward(xb, *params_bf16))
    ref_b = jnp.maximum(xb @ w1 + b1, 0.0) @ w2 + b2
    assert out_b.shape == (384, OUTPUT_SIZE)
    assert jnp.allclose(out_b, ref_b, atol=5e-2, rtol=5e-2)  # bf16 storage, f32 accumulation

    print("KERNEL_OK")
</pallas_src>

<mosaic_0001>
module attributes {stable_mosaic.version = 11 : i64} {
  func.func @mlp_kernel(%arg0: i32, %arg1: memref<8x784xf32, #tpu.memory_space<vmem>>, %arg2: memref<784x128xf32, #tpu.memory_space<vmem>>, %arg3: memref<1x128xf32, #tpu.memory_space<vmem>>, %arg4: memref<128x10xf32, #tpu.memory_space<vmem>>, %arg5: memref<1x10xf32, #tpu.memory_space<vmem>>, %arg6: memref<8x10xf32, #tpu.memory_space<vmem>>) attributes {dimension_semantics = [#tpu.dimension_semantics<parallel>], iteration_bounds = array<i64: 1>, scalar_prefetch = 0 : i64, scratch_operands = 0 : i64, tpu.core_type = #tpu.core_type<tc>, window_params = [{transform_indices = @transform_0, window_bounds = array<i64: 8, 784>}, {pipeline_mode = #tpu.pipeline_mode<synchronous>, transform_indices = @transform_1, window_bounds = array<i64: 784, 128>}, {pipeline_mode = #tpu.pipeline_mode<synchronous>, transform_indices = @transform_2, window_bounds = array<i64: 1, 128>}, {pipeline_mode = #tpu.pipeline_mode<synchronous>, transform_indices = @transform_3, window_bounds = array<i64: 128, 10>}, {pipeline_mode = #tpu.pipeline_mode<synchronous>, transform_indices = @transform_4, window_bounds = array<i64: 1, 10>}, {transform_indices = @transform_5, window_bounds = array<i64: 8, 10>}]} {
    %c0 = arith.constant 0 : index
    %c0_0 = arith.constant 0 : index
    %0 = vector.load %arg1[%c0, %c0_0] : memref<8x784xf32, #tpu.memory_space<vmem>>, vector<8x784xf32>
    %c0_1 = arith.constant 0 : index
    %c0_2 = arith.constant 0 : index
    %1 = vector.load %arg2[%c0_1, %c0_2] : memref<784x128xf32, #tpu.memory_space<vmem>>, vector<784x128xf32>
    %cst = arith.constant dense<0.000000e+00> : vector<8x128xf32>
    %2 = tpu.matmul %0, %1, %cst {dimension_numbers = #tpu.dot_dimension_numbers<[1], [0], [0], [1], [0, 0, 1, 1], [], []>} : vector<8x784xf32>, vector<784x128xf32>, vector<8x128xf32> -> vector<8x128xf32>
    %c0_3 = arith.constant 0 : index
    %c0_4 = arith.constant 0 : index
    %3 = vector.load %arg3[%c0_3, %c0_4] : memref<1x128xf32, #tpu.memory_space<vmem>>, vector<1x128xf32>
    %4 = vector.broadcast %3 : vector<1x128xf32> to vector<8x128xf32>
    %5 = arith.addf %2, %4 : vector<8x128xf32>
    %cst_5 = arith.constant 0.000000e+00 : f32
    %6 = vector.broadcast %cst_5 : f32 to vector<8x128xf32>
    %7 = arith.maximumf %5, %6 : vector<8x128xf32>
    %c0_6 = arith.constant 0 : index
    %c0_7 = arith.constant 0 : index
    %8 = vector.load %arg4[%c0_6, %c0_7] : memref<128x10xf32, #tpu.memory_space<vmem>>, vector<128x10xf32>
    %cst_8 = arith.constant dense<0.000000e+00> : vector<8x10xf32>
    %9 = tpu.matmul %7, %8, %cst_8 {dimension_numbers = #tpu.dot_dimension_numbers<[1], [0], [0], [1], [0, 0, 1, 1], [], []>} : vector<8x128xf32>, vector<128x10xf32>, vector<8x10xf32> -> vector<8x10xf32>
    %c0_9 = arith.constant 0 : index
    %c0_10 = arith.constant 0 : index
    %10 = vector.load %arg5[%c0_9, %c0_10] : memref<1x10xf32, #tpu.memory_space<vmem>>, vector<1x10xf32>
    %11 = vector.broadcast %10 : vector<1x10xf32> to vector<8x10xf32>
    %12 = arith.addf %9, %11 : vector<8x10xf32>
    %c0_11 = arith.constant 0 : index
    %c0_12 = arith.constant 0 : index
    %13 = vector.load %arg6[%c0_11, %c0_12] : memref<8x10xf32, #tpu.memory_space<vmem>>, vector<8x10xf32>
    tpu.vector_store %arg6[%c0_11, %c0_12], %12 {strides = array<i32>} : memref<8x10xf32, #tpu.memory_space<vmem>>, vector<8x10xf32>,
    return
  }
  func.func @transform_0(%arg0: i32) -> (i32, i32) {
    %c0_i32 = arith.constant 0 : i32
    %c0_i32_0 = arith.constant 0 : i32
    return %arg0, %c0_i32 : i32, i32
  }
  func.func @transform_1(%arg0: i32) -> (i32, i32) {
    %c0_i32 = arith.constant 0 : i32
    %c0_i32_0 = arith.constant 0 : i32
    %c0_i32_1 = arith.constant 0 : i32
    return %c0_i32, %c0_i32_0 : i32, i32
  }
  func.func @transform_2(%arg0: i32) -> (i32, i32) {
    %c0_i32 = arith.constant 0 : i32
    %c0_i32_0 = arith.constant 0 : i32
    %c0_i32_1 = arith.constant 0 : i32
    return %c0_i32, %c0_i32_0 : i32, i32
  }
  func.func @transform_3(%arg0: i32) -> (i32, i32) {
    %c0_i32 = arith.constant 0 : i32
    %c0_i32_0 = arith.constant 0 : i32
    %c0_i32_1 = arith.constant 0 : i32
    return %c0_i32, %c0_i32_0 : i32, i32
  }
  func.func @transform_4(%arg0: i32) -> (i32, i32) {
    %c0_i32 = arith.constant 0 : i32
    %c0_i32_0 = arith.constant 0 : i32
    %c0_i32_1 = arith.constant 0 : i32
    return %c0_i32, %c0_i32_0 : i32, i32
  }
  func.func @transform_5(%arg0: i32) -> (i32, i32) {
    %c0_i32 = arith.constant 0 : i32
    %c0_i32_0 = arith.constant 0 : i32
    return %arg0, %c0_i32 : i32, i32
  }
}

</mosaic_0001>

<llo_original>
// kernel: neural_net_forward.1
$region0: #{neural_net_forward.1}
  #allocation0 [shape = 'u32[]', space=smem, size = 0x4, offset = 0x4, fixed_abs, tag = 'smem constant byte address 0x4 - core index']
  #allocation1 [shape = 'u32[144,128]{1,0:T(1,128)}', space=vmem, size = 0x12000, scoped, tag = 'internal scratch']
  %s0 = inlined_call_operand.vmem [shape: f32[8,784], index: 0, kind: input, shape index: {}]
  %s1 = inlined_call_operand.hbm [shape: f32[784,128], index: 1, kind: input, shape index: {}]
  %s2 = inlined_call_operand.vmem [shape: f32[1,128], index: 2, kind: input, shape index: {}]
  %s3 = inlined_call_operand.vmem [shape: f32[128,10], index: 3, kind: input, shape index: {}]
  %s4 = inlined_call_operand.vmem [shape: f32[1,10], index: 4, kind: input, shape index: {}]
  %s5 = inlined_call_operand.hbm [shape: f32[8,10], index: 5, kind: output, shape index: {}]
  %s6 = sld [smem:[#allocation0]]
  $region34: #{neural_net_forward.1} parent=0
    _
  %s8 = ssub.s32 1, %s6
  %s9 = scalar_select 0, %s8, %s6
  $region1: #{neural_net_forward.1} parent=0
    #allocation2 [shape = 'u8[401408]{0}', space=vmem, size = 0x62000, scoped, tag = 'input window, operand 1, single buffered']
    #allocation3 [shape = 's32[1]{0}', space=sflag, size = 0x4, scoped, tag = 'scoped memory for neural_net_forward.1']
    #allocation4 [shape = 's32[1]{0}', space=sflag, size = 0x4, scoped, tag = 'scoped memory for neural_net_forward.1']
    #allocation5 [shape = 'u8[4096]{0}', space=vmem, size = 0x1000, scoped, tag = 'output window, operand 0, single buffered']
    %10 = vsyncpa [#allocation3], 0
    %11 = vsyncpa [#allocation4], 0
    // Predicated region
    $region2: #{neural_net_forward.1} parent=1 // pred_check
      _
    $region3: #{neural_net_forward.1} parent=1 // pred_check_branch
      %13 = sbr.rel (0) target = $region5
    $region4: #{neural_net_forward.1} parent=1 // pred_region
      _
    $region5: #{neural_net_forward.1} parent=1 // pred_fallthru
      _
    // Predicated region
    $region6: #{neural_net_forward.1} parent=1 // pred_check
      _
    $region7: #{neural_net_forward.1} parent=1 // pred_check_branch
      %15 = sbr.rel (0) target = $region9
    $region8: #{neural_net_forward.1} parent=1 // pred_region
      %s17 = ssub.s32 12544, 12544
      %18 = vsyncadd [#allocation3], %s17
      %s19 = sshll.u32 [#allocation2], 4
      %s20 = int_to_ptr.vmem [resolvable:$true] %s19
      %25 = dma.hbm_to_vmem [thread:$0]  %s1, 12544, %s20, [#allocation3], 128, 128, 8
    $region9: #{neural_net_forward.1} parent=1 // pred_fallthru
      _
    // Predicated region
    $region10: #{neural_net_forward.1} parent=1 // pred_check
      _
    $region11: #{neural_net_forward.1} parent=1 // pred_check_branch
      %27 = sbr.rel (0) target = $region13
    $region12: #{neural_net_forward.1} parent=1 // pred_region
      _
    $region13: #{neural_net_forward.1} parent=1 // pred_fallthru
      _
    // Predicated region
    $region14: #{neural_net_forward.1} parent=1 // pred_check
      _
    $region15: #{neural_net_forward.1} parent=1 // pred_check_branch
      %29 = sbr.rel (0) target = $region17
    $region16: #{neural_net_forward.1} parent=1 // pred_region
      _
    $region17: #{neural_net_forward.1} parent=1 // pred_fallthru
      _
    // Predicated region
    $region18: #{neural_net_forward.1} parent=1 // pred_check
      _
    $region19: #{neural_net_forward.1} parent=1 // pred_check_branch
      %31 = sbr.rel (0) target = $region21
    $region20: #{neural_net_forward.1} parent=1 // pred_region
      _
    $region21: #{neural_net_forward.1} parent=1 // pred_fallthru
      _
    // Predicated region
    $region22: #{neural_net_forward.1} parent=1 // pred_check
      _
    $region23: #{neural_net_forward.1} parent=1 // pred_check_branch
      %33 = sbr.rel (0) target = $region25
    $region24: #{neural_net_forward.1} parent=1 // pred_region
      %34 = dma.done [#allocation3], 12544
    $region25: #{neural_net_forward.1} parent=1 // pred_fallthru
      _
    %v35 = vld [vmem:[%s0] sm:$0xff]
    %v36 = vld [vmem:[%s0 + $0x8] sm:$0xff]
    %v37 = vld [vmem:[%s0 + $0x10] sm:$0xff]
    %v38 = vld [vmem:[%s0 + $0x18] sm:$0xff]
    %v39 = vld [vmem:[%s0 + $0x20] sm:$0xff]
    %v40 = vld [vmem:[%s0 + $0x28] sm:$0xff]
    %v41 = vld [vmem:[%s0 + $0x30] sm:$0xff]
    %v42 = vld [vmem:[#allocation2] sm:$0xff]
    %v43 = vld [vmem:[#allocation2 + $0x8] sm:$0xff]
    %v44 = vld [vmem:[#allocation2 + $0x10] sm:$0xff]
    %v45 = vld [vmem:[#allocation2 + $0x18] sm:$0xff]
    %v46 = vld [vmem:[#allocation2 + $0x20] sm:$0xff]
    %v47 = vld [vmem:[#allocation2 + $0x28] sm:$0xff]
    %v48 = vld [vmem:[#allocation2 + $0x30] sm:$0xff]
    %v49 = vld [vmem:[#allocation2 + $0x38] sm:$0xff]
    %v50 = vld [vmem:[#allocation2 + $0x40] sm:$0xff]
    %v51 = vld [vmem:[#allocation2 + $0x48] sm:$0xff]
    %v52 = vld [vmem:[#allocation2 + $0x50] sm:$0xff]
    %v53 = vld [vmem:[#allocation2 + $0x58] sm:$0xff]
    %v54 = vld [vmem:[#allocation2 + $0x60] sm:$0xff]
    %v55 = vld [vmem:[#allocation2 + $0x68] sm:$0xff]
    %v56 = vld [vmem:[#allocation2 + $0x70] sm:$0xff]
    %v57 = vld [vmem:[#allocation2 + $0x78] sm:$0xff]
    %v58 = vld [vmem:[#allocation2 + $0x80] sm:$0xff]
    %v59 = vld [vmem:[#allocation2 + $0x88] sm:$0xff]
    %v60 = vld [vmem:[#allocation2 + $0x90] sm:$0xff]
    %v61 = vld [vmem:[#allocation2 + $0x98] sm:$0xff]
    %v62 = vld [vmem:[#allocation2 + $0xa0] sm:$0xff]
    %v63 = vld [vmem:[#allocation2 + $0xa8] sm:$0xff]
    %v64 = vld [vmem:[#allocation2 + $0xb0] sm:$0xff]
    %v65 = vld [vmem:[#allocation2 + $0xb8] sm:$0xff]
    %v66 = vld [vmem:[#allocation2 + $0xc0] sm:$0xff]
    %v67 = vld [vmem:[#allocation2 + $0xc8] sm:$0xff]
    %v68 = vld [vmem:[#allocation2 + $0xd0] sm:$0xff]
    %v69 = vld [vmem:[#allocation2 + $0xd8] sm:$0xff]
    %v70 = vld [vmem:[#allocation2 + $0xe0] sm:$0xff]
    %v71 = vld [vmem:[#allocation2 + $0xe8] sm:$0xff]
    %v72 = vld [vmem:[#allocation2 + $0xf0] sm:$0xff]
    %v73 = vld [vmem:[#allocation2 + $0xf8] sm:$0xff]
    %v74 = vld [vmem:[#allocation2 + $0x100] sm:$0xff]
    %v75 = vld [vmem:[#allocation2 + $0x108] sm:$0xff]
    %v76 = vld [vmem:[#allocation2 + $0x110] sm:$0xff]
    %v77 = vld [vmem:[#allocation2 + $0x118] sm:$0xff]
    %v78 = vld [vmem:[#allocation2 + $0x120] sm:$0xff]
    %v79 = vld [vmem:[#allocation2 + $0x128] sm:$0xff]
    %v80 = vld [vmem:[#allocation2 + $0x130] sm:$0xff]
    %v81 = vld [vmem:[#allocation2 + $0x138] sm:$0xff]
    %v82 = vld [vmem:[#allocation2 + $0x140] sm:$0xff]
    %v83 = vld [vmem:[#allocation2 + $0x148] sm:$0xff]
    %v84 = vld [vmem:[#allocation2 + $0x150] sm:$0xff]
    %v85 = vld [vmem:[#allocation2 + $0x158] sm:$0xff]
    %v86 = vld [vmem:[#allocation2 + $0x160] sm:$0xff]
    %v87 = vld [vmem:[#allocation2 + $0x168] sm:$0xff]
    %v88 = vld [vmem:[#allocation2 + $0x170] sm:$0xff]
    %v89 = vld [vmem:[#allocation2 + $0x178] sm:$0xff]
    %v90 = vld [vmem:[#allocation2 + $0x180] sm:$0xff]
    %v91 = vld [vmem:[#allocation2 + $0x188] sm:$0xff]
    %v92 = vld [vmem:[#allocation2 + $0x190] sm:$0xff]
    %v93 = vld [vmem:[#allocation2 + $0x198] sm:$0xff]
    %v94 = vld [vmem:[#allocation2 + $0x1a0] sm:$0xff]
    %v95 = vld [vmem:[#allocation2 + $0x1a8] sm:$0xff]
    %v96 = vld [vmem:[#allocation2 + $0x1b0] sm:$0xff]
    %v97 = vld [vmem:[#allocation2 + $0x1b8] sm:$0xff]
    %v98 = vld [vmem:[#allocation2 + $0x1c0] sm:$0xff]
    %v99 = vld [vmem:[#allocation2 + $0x1c8] sm:$0xff]
    %v100 = vld [vmem:[#allocation2 + $0x1d0] sm:$0xff]
    %v101 = vld [vmem:[#allocation2 + $0x1d8] sm:$0xff]
    %v102 = vld [vmem:[#allocation2 + $0x1e0] sm:$0xff]
    %v103 = vld [vmem:[#allocation2 + $0x1e8] sm:$0xff]
    %v104 = vld [vmem:[#allocation2 + $0x1f0] sm:$0xff]
    %v105 = vld [vmem:[#allocation2 + $0x1f8] sm:$0xff]
    %v106 = vld [vmem:[#allocation2 + $0x200] sm:$0xff]
    %v107 = vld [vmem:[#allocation2 + $0x208] sm:$0xff]
    %v108 = vld [vmem:[#allocation2 + $0x210] sm:$0xff]
    %v109 = vld [vmem:[#allocation2 + $0x218] sm:$0xff]
    %v110 = vld [vmem:[#allocation2 + $0x220] sm:$0xff]
    %v111 = vld [vmem:[#allocation2 + $0x228] sm:$0xff]
    %v112 = vld [vmem:[#allocation2 + $0x230] sm:$0xff]
    %v113 = vld [vmem:[#allocation2 + $0x238] sm:$0xff]
    %v114 = vld [vmem:[#allocation2 + $0x240] sm:$0xff]
    %v115 = vld [vmem:[#allocation2 + $0x248] sm:$0xff]
    %v116 = vld [vmem:[#allocation2 + $0x250] sm:$0xff]
    %v117 = vld [vmem:[#allocation2 + $0x258] sm:$0xff]
    %v118 = vld [vmem:[#allocation2 + $0x260] sm:$0xff]
    %v119 = vld [vmem:[#allocation2 + $0x268] sm:$0xff]
    %v120 = vld [vmem:[#allocation2 + $0x270] sm:$0xff]
    %v121 = vld [vmem:[#allocation2 + $0x278] sm:$0xff]
    %v122 = vld [vmem:[#allocation2 + $0x280] sm:$0xff]
    %v123 = vld [vmem:[#allocation2 + $0x288] sm:$0xff]
    %v124 = vld [vmem:[#allocation2 + $0x290] sm:$0xff]
    %v125 = vld [vmem:[#allocation2 + $0x298] sm:$0xff]
    %v126 = vld [vmem:[#allocation2 + $0x2a0] sm:$0xff]
    %v127 = vld [vmem:[#allocation2 + $0x2a8] sm:$0xff]
    %v128 = vld [vmem:[#allocation2 + $0x2b0] sm:$0xff]
    %v129 = vld [vmem:[#allocation2 + $0x2b8] sm:$0xff]
    %v130 = vld [vmem:[#allocation2 + $0x2c0] sm:$0xff]
    %v131 = vld [vmem:[#allocation2 + $0x2c8] sm:$0xff]
    %v132 = vld [vmem:[#allocation2 + $0x2d0] sm:$0xff]
    %v133 = vld [vmem:[#allocation2 + $0x2d8] sm:$0xff]
    %v134 = vld [vmem:[#allocation2 + $0x2e0] sm:$0xff]
    %v135 = vld [vmem:[#allocation2 + $0x2e8] sm:$0xff]
    %v136 = vld [vmem:[#allocation2 + $0x2f0] sm:$0xff]
    %v137 = vld [vmem:[#allocation2 + $0x2f8] sm:$0xff]
    %v138 = vld [vmem:[#allocation2 + $0x300] sm:$0xff]
    %v139 = vld [vmem:[#allocation2 + $0x308] sm:$0xff]
    %v140 = vld [vmem:[%s2] sm:$0x1]
    %v142 = vlaneseq
    %v143 = vshrl.u32 %v142, 7
    %v144 = vsub.s32 0, %v143
    %v145 = vrot.slane %v140, %v144
    %vm147 = vcmask 130048
    %v149 = vsel %vm147, %v41, 0
    %151 = vmatprep.subr.mxu0 0.0
    %152 = vmatpush1.msra.mxu0 %v42
    %153 = vmatprep.subr.mxu0 0.0
    %154 = vmatpush1.msra.mxu0 %v43
    %155 = vmatprep.subr.mxu0 0.0
    %156 = vmatpush1.msra.mxu0 %v44
    %157 = vmatprep.subr.mxu0 0.0
    %158 = vmatpush1.msra.mxu0 %v45
    %159 = vmatprep.subr.mxu0 0.0
    %160 = vmatpush1.msra.mxu0 %v46
    %161 = vmatprep.subr.mxu0 0.0
    %162 = vmatpush1.msra.mxu0 %v47
    %163 = vmatprep.subr.mxu0 0.0
    %164 = vmatpush1.msra.mxu0 %v48
    %165 = vmatprep.subr.mxu0 0.0
    %166 = vmatpush1.msra.mxu0 %v49
    %167 = vmatprep.subr.mxu0 0.0
    %168 = vmatpush1.msra.mxu0 %v50
    %169 = vmatprep.subr.mxu0 0.0
    %170 = vmatpush1.msra.mxu0 %v51
    %171 = vmatprep.subr.mxu0 0.0
    %172 = vmatpush1.msra.mxu0 %v52
    %173 = vmatprep.subr.mxu0 0.0
    %174 = vmatpush1.msra.mxu0 %v53
    %175 = vmatprep.subr.mxu0 0.0
    %176 = vmatpush1.msra.mxu0 %v54
    %177 = vmatprep.subr.mxu0 0.0
    %178 = vmatpush1.msra.mxu0 %v55
    %179 = vmatprep.subr.mxu0 0.0
    %180 = vmatpush1.msra.mxu0 %v56
    %181 = vmatprep.subr.mxu0 0.0
    %182 = vmatpush1.msra.mxu0 %v57
    %183 = vmatprep.subr.mxu0 0.0
    %184 = vmatpush1.msra.mxu0 %v58
    %185 = vmatprep.subr.mxu0 0.0
    %186 = vmatpush1.msra.mxu0 %v59
    %187 = vmatprep.subr.mxu0 0.0
    %188 = vmatpush1.msra.mxu0 %v60
    %189 = vmatprep.subr.mxu0 0.0
    %190 = vmatpush1.msra.mxu0 %v61
    %191 = vmatprep.subr.mxu0 0.0
    %192 = vmatpush1.msra.mxu0 %v62
    %193 = vmatprep.subr.mxu0 0.0
    %194 = vmatpush1.msra.mxu0 %v63
    %195 = vmatprep.subr.mxu0 0.0
    %196 = vmatpush1.msra.mxu0 %v64
    %197 = vmatprep.subr.mxu0 0.0
    %198 = vmatpush1.msra.mxu0 %v65
    %199 = vmatprep.subr.mxu0 0.0
    %200 = vmatpush1.msra.mxu0 %v66
    %201 = vmatprep.subr.mxu0 0.0
    %202 = vmatpush1.msra.mxu0 %v67
    %203 = vmatprep.subr.mxu0 0.0
    %204 = vmatpush1.msra.mxu0 %v68
    %205 = vmatprep.subr.mxu0 0.0
    %206 = vmatpush1.msra.mxu0 %v69
    %207 = vmatprep.subr.mxu0 0.0
    %208 = vmatpush1.msra.mxu0 %v70
    %209 = vmatprep.subr.mxu0 0.0
    %210 = vmatpush1.msra.mxu0 %v71
    %211 = vmatprep.subr.mxu0 0.0
    %212 = vmatpush1.msra.mxu0 %v72
    %213 = vmatprep.subr.mxu0 0.0
    %214 = vmatpush1.msra.mxu0 %v73
    %215 = vmatprep.mubr.f32.mxu0 %v36
    %216 = vmatmul.mubr.f32.gmra.mrb[0].mxu0 %v35
    %v217 = vpop.f32.mrb[0].mxu0
    %v218 = vadd.f32 %v145, %v217
    %v219 = vpop.f32.mrb[0].mxu0
    %220 = vdwg.mxu0
    %221 = vmatprep.subr.mxu0 0.0
    %222 = vmatpush1.msra.mxu0 %v74
    %223 = vmatprep.subr.mxu0 0.0
    %224 = vmatpush1.msra.mxu0 %v75
    %225 = vmatprep.subr.mxu0 0.0
    %226 = vmatpush1.msra.mxu0 %v76
    %227 = vmatprep.subr.mxu0 0.0
    %228 = vmatpush1.msra.mxu0 %v77
    %229 = vmatprep.subr.mxu0 0.0
    %230 = vmatpush1.msra.mxu0 %v78
    %231 = vmatprep.subr.mxu0 0.0
    %232 = vmatpush1.msra.mxu0 %v79
    %233 = vmatprep.subr.mxu0 0.0
    %234 = vmatpush1.msra.mxu0 %v80
    %235 = vmatprep.subr.mxu0 0.0
    %236 = vmatpush1.msra.mxu0 %v81
    %237 = vmatprep.subr.mxu0 0.0
    %238 = vmatpush1.msra.mxu0 %v82
    %239 = vmatprep.subr.mxu0 0.0
    %240 = vmatpush1.msra.mxu0 %v83
    %241 = vmatprep.subr.mxu0 0.0
    %242 = vmatpush1.msra.mxu0 %v84
    %243 = vmatprep.subr.mxu0 0.0
    %244 = vmatpush1.msra.mxu0 %v85
    %245 = vmatprep.subr.mxu0 0.0
    %246 = vmatpush1.msra.mxu0 %v86
    %247 = vmatprep.subr.mxu0 0.0
    %248 = vmatpush1.msra.mxu0 %v87
    %249 = vmatprep.subr.mxu0 0.0
    %250 = vmatpush1.msra.mxu0 %v88
    %251 = vmatprep.subr.mxu0 0.0
    %252 = vmatpush1.msra.mxu0 %v89
    %253 = vmatprep.subr.mxu0 0.0
    %254 = vmatpush1.msra.mxu0 %v90
    %255 = vmatprep.subr.mxu0 0.0
    %256 = vmatpush1.msra.mxu0 %v91
    %257 = vmatprep.subr.mxu0 0.0
    %258 = vmatpush1.msra.mxu0 %v92
    %259 = vmatprep.subr.mxu0 0.0
    %260 = vmatpush1.msra.mxu0 %v93
    %261 = vmatprep.subr.mxu0 0.0
    %262 = vmatpush1.msra.mxu0 %v94
    %263 = vmatprep.subr.mxu0 0.0
    %264 = vmatpush1.msra.mxu0 %v95
    %265 = vmatprep.subr.mxu0 0.0
    %266 = vmatpush1.msra.mxu0 %v96
    %267 = vmatprep.subr.mxu0 0.0
    %268 = vmatpush1.msra.mxu0 %v97
    %269 = vmatprep.subr.mxu0 0.0
    %270 = vmatpush1.msra.mxu0 %v98
    %271 = vmatprep.subr.mxu0 0.0
    %272 = vmatpush1.msra.mxu0 %v99
    %273 = vmatprep.subr.mxu0 0.0
    %274 = vmatpush1.msra.mxu0 %v100
    %275 = vmatprep.subr.mxu0 0.0
    %276 = vmatpush1.msra.mxu0 %v101
    %277 = vmatprep.subr.mxu0 0.0
    %278 = vmatpush1.msra.mxu0 %v102
    %279 = vmatprep.subr.mxu0 0.0
    %280 = vmatpush1.msra.mxu0 %v103
    %281 = vmatprep.subr.mxu0 0.0
    %282 = vmatpush1.msra.mxu0 %v104
    %283 = vmatprep.subr.mxu0 0.0
    %284 = vmatpush1.msra.mxu0 %v105
    %285 = vmatprep.mubr.f32.mxu0 %v38
    %286 = vmatmul.mubr.f32.gmra.mrb[0].mxu0 %v37
    %v287 = vpop.f32.mrb[0].mxu0
    %v288 = vadd.f32 %v218, %v287
    %v289 = vpop.f32.mrb[0].mxu0
    %290 = vdwg.mxu0
    %291 = vmatprep.subr.mxu0 0.0
    %292 = vmatpush1.msra.mxu0 %v106
    %293 = vmatprep.subr.mxu0 0.0
    %294 = vmatpush1.msra.mxu0 %v107
    %295 = vmatprep.subr.mxu0 0.0
    %296 = vmatpush1.msra.mxu0 %v108
    %297 = vmatprep.subr.mxu0 0.0
    %298 = vmatpush1.msra.mxu0 %v109
    %299 = vmatprep.subr.mxu0 0.0
    %300 = vmatpush1.msra.mxu0 %v110
    %301 = vmatprep.subr.mxu0 0.0
    %302 = vmatpush1.msra.mxu0 %v111
    %303 = vmatprep.subr.mxu0 0.0
    %304 = vmatpush1.msra.mxu0 %v112
    %305 = vmatprep.subr.mxu0 0.0
    %306 = vmatpush1.msra.mxu0 %v113
    %307 = vmatprep.subr.mxu0 0.0
    %308 = vmatpush1.msra.mxu0 %v114
    %309 = vmatprep.subr.mxu0 0.0
    %310 = vmatpush1.msra.mxu0 %v115
    %311 = vmatprep.subr.mxu0 0.0
    %312 = vmatpush1.msra.mxu0 %v116
    %313 = vmatprep.subr.mxu0 0.0
    %314 = vmatpush1.msra.mxu0 %v117
    %315 = vmatprep.subr.mxu0 0.0
    %316 = vmatpush1.msra.mxu0 %v118
    %317 = vmatprep.subr.mxu0 0.0
    %318 = vmatpush1.msra.mxu0 %v119
    %319 = vmatprep.subr.mxu0 0.0
    %320 = vmatpush1.msra.mxu0 %v120
    %321 = vmatprep.subr.mxu0 0.0
    %322 = vmatpush1.msra.mxu0 %v121
    %323 = vmatprep.subr.mxu0 0.0
    %324 = vmatpush1.msra.mxu0 %v122
    %325 = vmatprep.subr.mxu0 0.0
    %326 = vmatpush1.msra.mxu0 %v123
    %327 = vmatprep.subr.mxu0 0.0
    %328 = vmatpush1.msra.mxu0 %v124
    %329 = vmatprep.subr.mxu0 0.0
    %330 = vmatpush1.msra.mxu0 %v125
    %331 = vmatprep.subr.mxu0 0.0
    %332 = vmatpush1.msra.mxu0 %v126
    %333 = vmatprep.subr.mxu0 0.0
    %334 = vmatpush1.msra.mxu0 %v127
    %335 = vmatprep.subr.mxu0 0.0
    %336 = vmatpush1.msra.mxu0 %v128
    %337 = vmatprep.subr.mxu0 0.0
    %338 = vmatpush1.msra.mxu0 %v129
    %339 = vmatprep.subr.mxu0 0.0
    %340 = vmatpush1.msra.mxu0 %v130
    %341 = vmatprep.subr.mxu0 0.0
    %342 = vmatpush1.msra.mxu0 %v131
    %343 = vmatprep.subr.mxu0 0.0
    %344 = vmatpush1.msra.mxu0 %v132
    %345 = vmatprep.subr.mxu0 0.0
    %346 = vmatpush1.msra.mxu0 %v133
    %347 = vmatprep.subr.mxu0 0.0
    %348 = vmatpush1.msra.mxu0 %v134
    %349 = vmatprep.subr.mxu0 0.0
    %350 = vmatpush1.msra.mxu0 %v135
    %351 = vmatprep.subr.mxu0 0.0
    %352 = vmatpush1.msra.mxu0 %v136
    %353 = vmatprep.subr.mxu0 0.0
    %354 = vmatpush1.msra.mxu0 %v137
    %355 = vmatprep.mubr.f32.mxu0 %v40
    %356 = vmatmul.mubr.f32.gmra.mrb[0].mxu0 %v39
    %v357 = vpop.f32.mrb[0].mxu0
    %v358 = vadd.f32 %v288, %v357
    %v359 = vpop.f32.mrb[0].mxu0
    %360 = vdwg.mxu0
    %361 = vmatprep.subr.mxu0 0.0
    %362 = vmatpush1.msra.mxu0 %v138
    %363 = vmatprep.subr.mxu0 0.0
    %364 = vmatpush1.msra.mxu0 %v139
    %365 = vmatprep.subr.mxu0 0.0
    %366 = vmatpush1.msra.mxu0 0.0
    %367 = vmatprep.subr.mxu0 0.0
    %368 = vmatpush1.msra.mxu0 0.0
    %369 = vmatprep.subr.mxu0 0.0
    %370 = vmatpush1.msra.mxu0 0.0
    %371 = vmatprep.subr.mxu0 0.0
    %372 = vmatpush1.msra.mxu0 0.0
    %373 = vmatprep.subr.mxu0 0.0
    %374 = vmatpush1.msra.mxu0 0.0
    %375 = vmatprep.subr.mxu0 0.0
    %376 = vmatpush1.msra.mxu0 0.0
    %377 = vmatprep.subr.mxu0 0.0
    %378 = vmatpush1.msra.mxu0 0.0
    %379 = vmatprep.subr.mxu0 0.0
    %380 = vmatpush1.msra.mxu0 0.0
    %381 = vmatprep.subr.mxu0 0.0
    %382 = vmatpush1.msra.mxu0 0.0
    %383 = vmatprep.subr.mxu0 0.0
    %384 = vmatpush1.msra.mxu0 0.0
    %385 = vmatprep.subr.mxu0 0.0
    %386 = vmatpush1.msra.mxu0 0.0
    %387 = vmatprep.subr.mxu0 0.0
    %388 = vmatpush1.msra.mxu0 0.0
    %389 = vmatprep.subr.mxu0 0.0
    %390 = vmatpush1.msra.mxu0 0.0
    %391 = vmatprep.subr.mxu0 0.0
    %392 = vmatpush1.msra.mxu0 0.0
    %393 = vmatprep.subr.mxu0 0.0
    %394 = vmatpush1.msra.mxu0 0.0
    %395 = vmatprep.subr.mxu0 0.0
    %396 = vmatpush1.msra.mxu0 0.0
    %397 = vmatprep.subr.mxu0 0.0
    %398 = vmatpush1.msra.mxu0 0.0
    %399 = vmatprep.subr.mxu0 0.0
    %400 = vmatpush1.msra.mxu0 0.0
    %401 = vmatprep.subr.mxu0 0.0
    %402 = vmatpush1.msra.mxu0 0.0
    %403 = vmatprep.subr.mxu0 0.0
    %404 = vmatpush1.msra.mxu0 0.0
    %405 = vmatprep.subr.mxu0 0.0
    %406 = vmatpush1.msra.mxu0 0.0
    %407 = vmatprep.subr.mxu0 0.0
    %408 = vmatpush1.msra.mxu0 0.0
    %409 = vmatprep.subr.mxu0 0.0
    %410 = vmatpush1.msra.mxu0 0.0
    %411 = vmatprep.subr.mxu0 0.0
    %412 = vmatpush1.msra.mxu0 0.0
    %413 = vmatprep.subr.mxu0 0.0
    %414 = vmatpush1.msra.mxu0 0.0
    %415 = vmatprep.subr.mxu0 0.0
    %416 = vmatpush1.msra.mxu0 0.0
    %417 = vmatprep.subr.mxu0 0.0
    %418 = vmatpush1.msra.mxu0 0.0
    %419 = vmatprep.subr.mxu0 0.0
    %420 = vmatpush1.msra.mxu0 0.0
    %421 = vmatprep.subr.mxu0 0.0
    %422 = vmatpush1.msra.mxu0 0.0
    %423 = vmatprep.subr.mxu0 0.0
    %424 = vmatpush1.msra.mxu0 0.0
    %425 = vmatprep.mubr.f32.mxu0 0.0
    %426 = vmatmul.mubr.f32.gmra.mrb[0].mxu0 %v149
    %v427 = vpop.f32.mrb[0].mxu0
    %v428 = vadd.f32 %v358, %v427
    %v429 = vpop.f32.mrb[0].mxu0
    %430 = vdwg.mxu0
    %v431 = vmax.f32 %v428, 0.0
    %v432 = vld [vmem:[%s3] sm:$0xff]
    %v433 = vld [vmem:[%s3 + $0x8] sm:$0xff]
    %v434 = vld [vmem:[%s3 + $0x10] sm:$0xff]
    %v435 = vld [vmem:[%s3 + $0x18] sm:$0xff]
    %v436 = vld [vmem:[%s3 + $0x20] sm:$0xff]
    %v437 = vld [vmem:[%s3 + $0x28] sm:$0xff]
    %v438 = vld [vmem:[%s3 + $0x30] sm:$0xff]
    %v439 = vld [vmem:[%s3 + $0x38] sm:$0xff]
    %v440 = vld [vmem:[%s3 + $0x40] sm:$0xff]
    %v441 = vld [vmem:[%s3 + $0x48] sm:$0xff]
    %v442 = vld [vmem:[%s3 + $0x50] sm:$0xff]
    %v443 = vld [vmem:[%s3 + $0x58] sm:$0xff]
    %v444 = vld [vmem:[%s3 + $0x60] sm:$0xff]
    %v445 = vld [vmem:[%s3 + $0x68] sm:$0xff]
    %v446 = vld [vmem:[%s3 + $0x70] sm:$0xff]
    %v447 = vld [vmem:[%s3 + $0x78] sm:$0xff]
    %v448 = vld [vmem:[%s4] sm:$0x1]
    %v450 = vlaneseq
    %v451 = vshrl.u32 %v450, 7
    %v452 = vsub.s32 0, %v451
    %v453 = vrot.slane %v448, %v452
    %455 = vmatprep.subr.mxu0 0.0
    %456 = vmatpush1.msra.mxu0 %v432
    %457 = vmatprep.subr.mxu0 0.0
    %458 = vmatpush1.msra.mxu0 %v433
    %459 = vmatprep.subr.mxu0 0.0
    %460 = vmatpush1.msra.mxu0 %v434
    %461 = vmatprep.subr.mxu0 0.0
    %462 = vmatpush1.msra.mxu0 %v435
    %463 = vmatprep.subr.mxu0 0.0
    %464 = vmatpush1.msra.mxu0 %v436
    %465 = vmatprep.subr.mxu0 0.0
    %466 = vmatpush1.msra.mxu0 %v437
    %467 = vmatprep.subr.mxu0 0.0
    %468 = vmatpush1.msra.mxu0 %v438
    %469 = vmatprep.subr.mxu0 0.0
    %470 = vmatpush1.msra.mxu0 %v439
    %471 = vmatprep.subr.mxu0 0.0
    %472 = vmatpush1.msra.mxu0 %v440
    %473 = vmatprep.subr.mxu0 0.0
    %474 = vmatpush1.msra.mxu0 %v441
    %475 = vmatprep.subr.mxu0 0.0
    %476 = vmatpush1.msra.mxu0 %v442
    %477 = vmatprep.subr.mxu0 0.0
    %478 = vmatpush1.msra.mxu0 %v443
    %479 = vmatprep.subr.mxu0 0.0
    %480 = vmatpush1.msra.mxu0 %v444
    %481 = vmatprep.subr.mxu0 0.0
    %482 = vmatpush1.msra.mxu0 %v445
    %483 = vmatprep.subr.mxu0 0.0
    %484 = vmatpush1.msra.mxu0 %v446
    %485 = vmatprep.subr.mxu0 0.0
    %486 = vmatpush1.msra.mxu0 %v447
    %487 = vmatprep.subr.mxu0 0.0
    %488 = vmatpush1.msra.mxu0 0.0
    %489 = vmatprep.subr.mxu0 0.0
    %490 = vmatpush1.msra.mxu0 0.0
    %491 = vmatprep.subr.mxu0 0.0
    %492 = vmatpush1.msra.mxu0 0.0
    %493 = vmatprep.subr.mxu0 0.0
    %494 = vmatpush1.msra.mxu0 0.0
    %495 = vmatprep.subr.mxu0 0.0
    %496 = vmatpush1.msra.mxu0 0.0
    %497 = vmatprep.subr.mxu0 0.0
    %498 = vmatpush1.msra.mxu0 0.0
    %499 = vmatprep.subr.mxu0 0.0
    %500 = vmatpush1.msra.mxu0 0.0
    %501 = vmatprep.subr.mxu0 0.0
    %502 = vmatpush1.msra.mxu0 0.0
    %503 = vmatprep.subr.mxu0 0.0
    %504 = vmatpush1.msra.mxu0 0.0
    %505 = vmatprep.subr.mxu0 0.0
    %506 = vmatpush1.msra.mxu0 0.0
    %507 = vmatprep.subr.mxu0 0.0
    %508 = vmatpush1.msra.mxu0 0.0
    %509 = vmatprep.subr.mxu0 0.0
    %510 = vmatpush1.msra.mxu0 0.0
    %511 = vmatprep.subr.mxu0 0.0
    %512 = vmatpush1.msra.mxu0 0.0
    %513 = vmatprep.subr.mxu0 0.0
    %514 = vmatpush1.msra.mxu0 0.0
    %515 = vmatprep.subr.mxu0 0.0
    %516 = vmatpush1.msra.mxu0 0.0
    %517 = vmatprep.subr.mxu0 0.0
    %518 = vmatpush1.msra.mxu0 0.0
    %519 = vmatprep.mubr.f32.mxu0 0.0
    %520 = vmatmul.mubr.f32.gmra.mrb[0].mxu0 %v431
    %v521 = vpop.f32.mrb[0].mxu0
    %v522 = vadd.f32 %v453, %v521
    %v523 = vpop.f32.mrb[0].mxu0
    %524 = vdwg.mxu0
    %vm525 = vcmask 80896
    %526 = vst.msk [vmem:[#allocation5] sm:$0xff] %vm525, %v522
    // Predicated region
    $region26: #{neural_net_forward.1} parent=1 // pred_check
      _
    $region27: #{neural_net_forward.1} parent=1 // pred_check_branch
      %528 = sbr.rel (0) target = $region29
    $region28: #{neural_net_forward.1} parent=1 // pred_region
      %s530 = ssub.s32 128, 128
      %531 = vsyncadd [#allocation4], %s530
      %s533 = sshll.u32 [#allocation5], 4
      %s534 = int_to_ptr.vmem [resolvable:$true] %s533
      %536 = dma.vmem_to_hbm [thread:$0]  %s534, 128, %s5, [#allocation4]
    $region29: #{neural_net_forward.1} parent=1 // pred_fallthru
      _
    // Predicated region
    $region30: #{neural_net_forward.1} parent=1 // pred_check
      _
    $region31: #{neural_net_forward.1} parent=1 // pred_check_branch
      %538 = sbr.rel (0) target = $region33
    $region32: #{neural_net_forward.1} parent=1 // pred_region
      %539 = dma.done [#allocation4], 128
    $region33: #{neural_net_forward.1} parent=1 // pred_fallthru
      _
    %540 = vsyncpa [#allocation3], 1
    %541 = vsyncpa [#allocation4], 1

</llo_original>
